<compile_context>
chip_gen: v5e
topology: v5e:2x2
jax: 0.10.0
libtpu: 0.0.40
codegen_flags: <defaults>
</compile_context>

<pallas_src>
from functools import partial

import jax
import jax.numpy as jnp
from jax import lax
from jax.experimental import pallas as pl
from jax.experimental.pallas import tpu as pltpu


_MASK_VALUE = -float(jnp.finfo(jnp.float32).max)


def _vmem_limit_bytes():
    cap = 128 * 1024 * 1024
    try:
        cap = int(getattr(pltpu.get_tpu_info(), "vmem_capacity_bytes", cap))
    except Exception:
        pass
    # ~half of physical VMEM: 64 MiB on v5e/v6e (128 MiB), 32 MiB on v7x (64 MiB/TC).
    return min(64 * 1024 * 1024, max(cap // 2, 16 * 1024 * 1024))


_VMEM_LIMIT = _vmem_limit_bytes()


def _pick_tile(n, cap, align):
    """Largest tile <= cap that evenly divides n (aligned), else the full dim."""
    if n <= cap:
        return n
    for t in range(cap, 0, -1):
        if n % t == 0 and t % align == 0:
            return t
    return n


def _gelu_tanh(x):
    # tanh-approximation GELU (EUP tanh).
    # TODO(synk): PyTorch nn.GELU() default is the exact erf formulation; the tanh
    # approximation is used here (max abs difference ~1e-3).
    c = 0.7978845608028654  # sqrt(2/pi)
    return 0.5 * x * (1.0 + jnp.tanh(c * (x + 0.044715 * x * x * x)))


# ----------------------------------------------------------------------------
# Fused LayerNorm + projection:  y = LN(x) @ W   (W is bf16, output bf16)
# ----------------------------------------------------------------------------
def _ln_proj_kernel(x_ref, g_ref, b_ref, w_ref, o_ref, *, eps):
    x = x_ref[...].astype(jnp.float32)
    mean = jnp.mean(x, axis=-1, keepdims=True)
    xc = x - mean
    var = jnp.mean(xc * xc, axis=-1, keepdims=True)
    xn = xc * lax.rsqrt(var + eps) * g_ref[...].astype(jnp.float32) \
        + b_ref[...].astype(jnp.float32)
    y = jnp.dot(xn.astype(w_ref.dtype), w_ref[...],
                preferred_element_type=jnp.float32)
    o_ref[...] = y.astype(o_ref.dtype)


def _ln_proj_pallas(x2d, gamma, beta, w_t, eps=1e-5):
    R, F = x2d.shape
    Cout = w_t.shape[1]
    tm = _pick_tile(R, 512, 8)
    tn = _pick_tile(Cout, 512, 128)
    return pl.pallas_call(
        partial(_ln_proj_kernel, eps=eps),
        out_shape=jax.ShapeDtypeStruct((R, Cout), jnp.bfloat16),
        grid_spec=pltpu.PrefetchScalarGridSpec(
            num_scalar_prefetch=0,
            grid=(R // tm, Cout // tn),
            in_specs=[
                pl.BlockSpec((tm, F), lambda i, j: (i, 0)),
                pl.BlockSpec((1, F), lambda i, j: (0, 0)),
                pl.BlockSpec((1, F), lambda i, j: (0, 0)),
                pl.BlockSpec((F, tn), lambda i, j: (0, j)),
            ],
            out_specs=pl.BlockSpec((tm, tn), lambda i, j: (i, j)),
        ),
        compiler_params=pltpu.CompilerParams(
            dimension_semantics=("parallel", "parallel"),
            vmem_limit_bytes=_VMEM_LIMIT,
        ),
    )(x2d, gamma, beta, w_t)


# ----------------------------------------------------------------------------
# Projection with fused bias / residual (full-K):  y = x @ W (+ b) (+ res)
# ----------------------------------------------------------------------------
def _make_proj_kernel(has_bias, has_residual):
    def kernel(*refs):
        x_ref, w_ref = refs[0], refs[1]
        idx = 2
        b_ref = r_ref = None
        if has_bias:
            b_ref = refs[idx]; idx += 1
        if has_residual:
            r_ref = refs[idx]; idx += 1
        o_ref = refs[idx]
        y = jnp.dot(x_ref[...].astype(w_ref.dtype), w_ref[...],
                    preferred_element_type=jnp.float32)
        if has_bias:
            y = y + b_ref[...].astype(jnp.float32)
        if has_residual:
            y = y + r_ref[...].astype(jnp.float32)
        o_ref[...] = y.astype(o_ref.dtype)
    return kernel


def _proj_pallas(x, w_t, bias=None, residual=None, out_dtype=None):
    R, K = x.shape
    Cout = w_t.shape[1]
    out_dtype = x.dtype if out_dtype is None else out_dtype
    tm = _pick_tile(R, 512, 8)
    tn = _pick_tile(Cout, 512, 128)

    in_specs = [
        pl.BlockSpec((tm, K), lambda i, j: (i, 0)),
        pl.BlockSpec((K, tn), lambda i, j: (0, j)),
    ]
    operands = [x, w_t]
    if bias is not None:
        in_specs.append(pl.BlockSpec((1, tn), lambda i, j: (0, j)))
        operands.append(bias)
    if residual is not None:
        in_specs.append(pl.BlockSpec((tm, tn), lambda i, j: (i, j)))
        operands.append(residual)

    kernel = _make_proj_kernel(bias is not None, residual is not None)
    return pl.pallas_call(
        kernel,
        out_shape=jax.ShapeDtypeStruct((R, Cout), out_dtype),
        grid_spec=pltpu.PrefetchScalarGridSpec(
            num_scalar_prefetch=0,
            grid=(R // tm, Cout // tn),
            in_specs=in_specs,
            out_specs=pl.BlockSpec((tm, tn), lambda i, j: (i, j)),
        ),
        compiler_params=pltpu.CompilerParams(
            dimension_semantics=("parallel", "parallel"),
            vmem_limit_bytes=_VMEM_LIMIT,
        ),
    )(*operands)


# ----------------------------------------------------------------------------
# Fully fused FeedForward:  y = gelu(x @ W1 + b1) @ W2 + b2 + residual
# (hidden activation lives only in VMEM; accumulate over hidden-dim tiles)
# ----------------------------------------------------------------------------
def _ffn_kernel(x_ref, w1_ref, b1_ref, w2_ref, b2_ref, r_ref, o_ref, acc_ref):
    k_idx = pl.program_id(1)

    @pl.when(k_idx == 0)
    def _():
        acc_ref[...] = jnp.zeros_like(acc_ref)

    xb = x_ref[...].astype(w1_ref.dtype)
    h = jnp.dot(xb, w1_ref[...], preferred_element_type=jnp.float32)
    h = _gelu_tanh(h + b1_ref[...].astype(jnp.float32))
    acc_ref[...] += jnp.dot(h.astype(w2_ref.dtype), w2_ref[...],
                            preferred_element_type=jnp.float32)

    @pl.when(k_idx == pl.num_programs(1) - 1)
    def _():
        y = acc_ref[...] + b2_ref[...].astype(jnp.float32) \
            + r_ref[...].astype(jnp.float32)
        o_ref[...] = y.astype(o_ref.dtype)


def _ffn_pallas(x2d, w1_t, b1, w2_t, b2, residual2d):
    R, F = x2d.shape
    Hmid = w1_t.shape[1]
    tm = _pick_tile(R, 256, 8)
    th = _pick_tile(Hmid, 512, 128)
    return pl.pallas_call(
        _ffn_kernel,
        out_shape=jax.ShapeDtypeStruct((R, F), x2d.dtype),
        grid_spec=pltpu.PrefetchScalarGridSpec(
            num_scalar_prefetch=0,
            grid=(R // tm, Hmid // th),
            in_specs=[
                pl.BlockSpec((tm, F), lambda i, k: (i, 0)),
                pl.BlockSpec((F, th), lambda i, k: (0, k)),
                pl.BlockSpec((1, th), lambda i, k: (0, k)),
                pl.BlockSpec((th, F), lambda i, k: (k, 0)),
                pl.BlockSpec((1, F), lambda i, k: (0, 0)),
                pl.BlockSpec((tm, F), lambda i, k: (i, 0)),
            ],
            out_specs=pl.BlockSpec((tm, F), lambda i, k: (i, 0)),
            scratch_shapes=[pltpu.VMEM((tm, F), jnp.float32)],
        ),
        compiler_params=pltpu.CompilerParams(
            dimension_semantics=("parallel", "arbitrary"),
            vmem_limit_bytes=_VMEM_LIMIT,
        ),
    )(x2d, w1_t, b1, w2_t, b2, residual2d)


# ----------------------------------------------------------------------------
# Flash attention kernel (online softmax over KV tiles, heads via lane slices)
#   q  : (B, N, H*D)      bf16
#   kv : (B, M, 2*H*D)    bf16   (first H*D lanes = K, last H*D lanes = V)
# ----------------------------------------------------------------------------
def _flash_attn_kernel(q_ref, kv_ref, o_ref, m_ref, l_ref, acc_ref, *,
                       num_heads, head_dim, mid, scale, is_causal,
                       q_len, kv_len, tq, tk):
    q_idx = pl.program_id(1)
    kv_idx = pl.program_id(2)

    @pl.when(kv_idx == 0)
    def _init():
        m_ref[...] = jnp.full(m_ref.shape, _MASK_VALUE, jnp.float32)
        l_ref[...] = jnp.zeros_like(l_ref)
        acc_ref[...] = jnp.zeros_like(acc_ref)

    def _compute(apply_mask):
        if apply_mask:
            # Build the causal mask once per diagonal tile, shared by all heads.
            offset = kv_len - q_len
            row = lax.broadcasted_iota(jnp.int32, (tq, tk), 0) + q_idx * tq
            col = lax.broadcasted_iota(jnp.int32, (tq, tk), 1) + kv_idx * tk
            keep = col <= row + offset
        for h in range(num_heads):
            # Per-head Ref slices: only (tq, D)/(tk, D) live at a time.
            qh = q_ref[0, :, h * head_dim:(h + 1) * head_dim]
            kh = kv_ref[0, :, h * head_dim:(h + 1) * head_dim]
            vh = kv_ref[0, :, mid + h * head_dim:mid + (h + 1) * head_dim]
            # Q @ K^T contracting on the last dims (no transposed copy of K).
            s = lax.dot_general(qh, kh, (((1,), (1,)), ((), ())),
                                preferred_element_type=jnp.float32) * scale
            if apply_mask:
                s = jnp.where(keep, s, _MASK_VALUE)
            m_prev = m_ref[:, h:h + 1]                                  # (tq, 1)
            m_new = jnp.maximum(m_prev, jnp.max(s, axis=-1, keepdims=True))
            alpha = jnp.exp(m_prev - m_new)
            p = jnp.exp(s - m_new)                                      # (tq, tk) f32
            l_ref[:, h:h + 1] = alpha * l_ref[:, h:h + 1] \
                + jnp.sum(p, axis=-1, keepdims=True)
            acc_ref[h] = alpha * acc_ref[h] + jnp.dot(
                p.astype(vh.dtype), vh, preferred_element_type=jnp.float32)
            m_ref[:, h:h + 1] = m_new

    if is_causal:
        offset = kv_len - q_len
        q_first = q_idx * tq
        q_last = q_first + (tq - 1)
        kv_first = kv_idx * tk
        kv_last = kv_first + (tk - 1)
        not_fully_masked = kv_first <= q_last + offset   # skip fully-masked tiles
        fully_kept = kv_last <= q_first + offset         # mask only diagonal tiles

        @pl.when(jnp.logical_and(not_fully_masked, fully_kept))
        def _():
            _compute(apply_mask=False)

        @pl.when(jnp.logical_and(not_fully_masked, jnp.logical_not(fully_kept)))
        def _():
            _compute(apply_mask=True)
    else:
        _compute(apply_mask=False)

    @pl.when(kv_idx == pl.num_programs(2) - 1)
    def _finalize():
        inv = pl.reciprocal(l_ref[...], approx=True)                    # (tq, H)
        outs = [(acc_ref[h] * inv[:, h:h + 1]).astype(o_ref.dtype)      # bf16 per head
                for h in range(num_heads)]
        o_ref[0] = jnp.concatenate(outs, axis=-1)                       # lane-dense store


def _flash_attention(q, kv, *, num_heads, head_dim, scale, is_causal):
    B, N, mid = q.shape
    M = kv.shape[1]
    tq = _pick_tile(N, 256, 8)
    tk = _pick_tile(M, 256, 8)
    offset = M - N

    q_spec = pl.BlockSpec((1, tq, mid), lambda b, qi, ki: (b, qi, 0))
    if is_causal:
        # Clamp the KV block index so fully-masked tiles alias the previous block
        # and Pallas skips the DMA (compute is already skipped via pl.when).
        def kv_map(b, qi, ki):
            last = (qi * tq + (tq - 1) + offset) // tk
            return (b, jnp.minimum(ki, jnp.maximum(last, 0)), 0)
    else:
        def kv_map(b, qi, ki):
            return (b, ki, 0)
    kv_spec = pl.BlockSpec((1, tk, 2 * mid), kv_map)

    kernel = partial(_flash_attn_kernel, num_heads=num_heads, head_dim=head_dim,
                     mid=mid, scale=scale, is_causal=is_causal,
                     q_len=N, kv_len=M, tq=tq, tk=tk)
    return pl.pallas_call(
        kernel,
        out_shape=jax.ShapeDtypeStruct((B, N, mid), jnp.bfloat16),
        grid_spec=pltpu.PrefetchScalarGridSpec(
            num_scalar_prefetch=0,
            grid=(B, N // tq, M // tk),
            in_specs=[q_spec, kv_spec],
            out_specs=pl.BlockSpec((1, tq, mid), lambda b, qi, ki: (b, qi, 0)),
            scratch_shapes=[
                pltpu.VMEM((tq, num_heads), jnp.float32),               # packed running max
                pltpu.VMEM((tq, num_heads), jnp.float32),               # packed running sum
                pltpu.VMEM((num_heads, tq, head_dim), jnp.float32),     # running output
            ],
        ),
        compiler_params=pltpu.CompilerParams(
            dimension_semantics=("parallel", "parallel", "arbitrary"),
            vmem_limit_bytes=_VMEM_LIMIT,
        ),
    )(q, kv)


# ----------------------------------------------------------------------------
# Module wrappers (forward only, PyTorch-default parameter init, bf16 weights)
# ----------------------------------------------------------------------------
class AttentionPallas:
    """Attention = LN(x)/LN(ctx) -> to_q / fused to_kv -> flash attention -> to_out."""

    def __init__(self, features, *, head_features, num_heads, out_features=None,
                 context_features=None, key=None):
        self.num_heads = num_heads
        self.head_features = head_features
        self.scale = head_features ** -0.5
        mid = head_features * num_heads
        self.mid_features = mid
        ctx_f = context_features if context_features is not None else features
        out_f = out_features if out_features is not None else features
        self.out_features = out_f

        k1, k2, k3, k4 = jax.random.split(key, 4)

        # LayerNorm params (PyTorch defaults: weight=1, bias=0, eps=1e-5).
        self.norm_g = jnp.ones((1, features), jnp.float32)
        self.norm_b = jnp.zeros((1, features), jnp.float32)
        self.ctx_norm_g = jnp.ones((1, ctx_f), jnp.float32)
        self.ctx_norm_b = jnp.zeros((1, ctx_f), jnp.float32)

        # to_q (no bias); pre-transposed (features, mid), stored bf16 for the MXU.
        bq = 1.0 / (features ** 0.5)
        self.wq_t = jax.random.uniform(
            k1, (features, mid), jnp.float32, -bq, bq).astype(jnp.bfloat16)
        # to_kv (no bias); single (2*mid, ctx_f) matrix kept FUSED and pre-transposed
        # to (ctx_f, 2*mid): one GEMM produces [K | V] along the lane dim.
        bkv = 1.0 / (ctx_f ** 0.5)
        w_kv = jax.random.uniform(k2, (2 * mid, ctx_f), jnp.float32, -bkv, bkv)
        self.wkv_t = jnp.transpose(w_kv).astype(jnp.bfloat16)           # (ctx_f, 2*mid)
        # to_out (with bias).
        bo = 1.0 / (mid ** 0.5)
        self.wo_t = jnp.transpose(
            jax.random.uniform(k3, (out_f, mid), jnp.float32, -bo, bo)
        ).astype(jnp.bfloat16)                                          # (mid, out_f)
        self.bo = jax.random.uniform(k4, (1, out_f), jnp.float32, -bo, bo)

    def __call__(self, x, context=None, causal=False, residual=None):
        B, N, F = x.shape
        ctx = x if context is None else context
        M, CF = ctx.shape[1], ctx.shape[2]
        mid = self.mid_features

        # LayerNorm fused directly into the projections (no HBM round trip of LN(x)).
        q = _ln_proj_pallas(x.reshape(B * N, F), self.norm_g, self.norm_b,
                            self.wq_t)                                  # (B*N, mid) bf16
        kv = _ln_proj_pallas(ctx.reshape(B * M, CF), self.ctx_norm_g, self.ctx_norm_b,
                             self.wkv_t)                                # (B*M, 2*mid) bf16

        attn = _flash_attention(
            q.reshape(B, N, mid), kv.reshape(B, M, 2 * mid),
            num_heads=self.num_heads, head_dim=self.head_features,
            scale=self.scale, is_causal=causal)                         # (B, N, mid) bf16

        res2d = None if residual is None else residual.reshape(B * N, self.out_features)
        y = _proj_pallas(attn.reshape(B * N, mid), self.wo_t,
                         bias=self.bo, residual=res2d, out_dtype=jnp.float32)
        return y.reshape(B, N, self.out_features)


class FeedForwardPallas:
    """Linear -> GELU -> Linear, fully fused (hidden activation stays in VMEM)."""

    def __init__(self, features, multiplier, key):
        midf = features * multiplier
        k1, k2, k3, k4 = jax.random.split(key, 4)
        b1 = 1.0 / (features ** 0.5)
        self.w1_t = jax.random.uniform(
            k1, (features, midf), jnp.float32, -b1, b1).astype(jnp.bfloat16)
        self.b1 = jax.random.uniform(k2, (1, midf), jnp.float32, -b1, b1)
        b2 = 1.0 / (midf ** 0.5)
        self.w2_t = jax.random.uniform(
            k3, (midf, features), jnp.float32, -b2, b2).astype(jnp.bfloat16)
        self.b2 = jax.random.uniform(k4, (1, features), jnp.float32, -b2, b2)

    def __call__(self, x, residual=None):
        B, N, F = x.shape
        x2 = x.reshape(B * N, F)
        res2d = x2 * 0.0 if residual is None else residual.reshape(B * N, F)
        y = _ffn_pallas(x2, self.w1_t, self.b1, self.w2_t, self.b2, res2d)
        return y.reshape(B, N, F)


class TransformerBlockPallas:
    def __init__(self, features, num_heads, head_features, multiplier,
                 context_features=None, key=jax.random.PRNGKey(0)):
        k1, k2, k3 = jax.random.split(key, 3)
        self.use_cross_attention = (context_features is not None
                                    and context_features > 0)
        self.attention = AttentionPallas(
            features, head_features=head_features, num_heads=num_heads, key=k1)
        if self.use_cross_attention:
            self.cross_attention = AttentionPallas(
                features, head_features=head_features, num_heads=num_heads,
                context_features=context_features, key=k2)
        self.feed_forward = FeedForwardPallas(features, multiplier, key=k3)

    def __call__(self, x, *, context=None, context_mask=None, causal=False):
        # TODO(synk): context_mask (per-token k/v gating) and arbitrary attention
        # masks are not plumbed through; only mask=None / is_causal paths exist.
        x = self.attention(x, causal=causal, residual=x)
        if self.use_cross_attention:
            x = self.cross_attention(x, context=context, residual=x)
        x = self.feed_forward(x, residual=x)
        return x


# ----------------------------------------------------------------------------
# Pure-JAX reference (mirrors the PyTorch non-flash path, emulating the bf16
# operand rounding used on the MXU so parity stays tight)
# ----------------------------------------------------------------------------
_HI = lax.Precision.HIGHEST


def _mm_ref(a, w):
    # Emulate MXU bf16 operands with f32 accumulation.
    return jnp.dot(a.astype(jnp.bfloat16).astype(jnp.float32),
                   w.astype(jnp.float32), precision=_HI)


def _layernorm_ref(x, g, b, eps=1e-5):
    x32 = x.astype(jnp.float32)
    mean = jnp.mean(x32, -1, keepdims=True)
    var = jnp.mean((x32 - mean) ** 2, -1, keepdims=True)
    return (x32 - mean) * lax.rsqrt(var + eps) * g + b


def _attention_ref(mod, x, context, causal):
    B, N, _ = x.shape
    ctx = x if context is None else context
    M = ctx.shape[1]
    H, D = mod.num_heads, mod.head_features
    mid = H * D
    xn = _layernorm_ref(x, mod.norm_g, mod.norm_b)
    cn = _layernorm_ref(ctx, mod.ctx_norm_g, mod.ctx_norm_b)
    q = _mm_ref(xn, mod.wq_t).astype(jnp.bfloat16)
    kv = _mm_ref(cn, mod.wkv_t).astype(jnp.bfloat16)
    k, v = kv[..., :mid], kv[..., mid:]
    qh = q.reshape(B, N, H, D).transpose(0, 2, 1, 3).astype(jnp.float32)
    kh = k.reshape(B, M, H, D).transpose(0, 2, 1, 3).astype(jnp.float32)
    vh = v.reshape(B, M, H, D).transpose(0, 2, 1, 3).astype(jnp.float32)
    sim = jnp.einsum("bhnd,bhmd->bhnm", qh, kh, precision=_HI) * mod.scale
    if causal:
        row = jnp.arange(N)[:, None]
        col = jnp.arange(M)[None, :]
        keep = col <= row + (M - N)
        sim = jnp.where(keep[None, None], sim, _MASK_VALUE)
    attn = jax.nn.softmax(sim, axis=-1)
    attn = attn.astype(jnp.bfloat16).astype(jnp.float32)
    out = jnp.einsum("bhnm,bhmd->bhnd", attn, vh, precision=_HI)
    out = out.transpose(0, 2, 1, 3).reshape(B, N, mid).astype(jnp.bfloat16)
    return _mm_ref(out, mod.wo_t) + mod.bo


def _feedforward_ref(mod, x):
    h = _mm_ref(x, mod.w1_t) + mod.b1
    h = _gelu_tanh(h)
    return _mm_ref(h, mod.w2_t) + mod.b2


def _transformer_block_ref(block, x, context, causal):
    y = _attention_ref(block.attention, x, None, causal) + x
    if block.use_cross_attention:
        y = _attention_ref(block.cross_attention, y, context, False) + y
    y = _feedforward_ref(block.feed_forward, y) + y
    return y


if __name__ == "__main__":
    key = jax.random.PRNGKey(0)
    kx, kc, km, kx2, km2 = jax.random.split(key, 5)

    ok = True

    # Test 1: small shapes consistent with the module:
    #   batch=2, seq=8, features=32 (num_heads=2 * head_features=16),
    #   FF multiplier=2, cross-attention context: seq=8, context_features=24.
    B, N, F = 2, 8, 32
    H, D = 2, 16
    MULT = 2
    CTX_F, M = 24, 8

    x = jax.random.normal(kx, (B, N, F), jnp.float32)
    context = jax.random.normal(kc, (B, M, CTX_F), jnp.float32)
    block = TransformerBlockPallas(F, num_heads=H, head_features=D,
                                   multiplier=MULT, context_features=CTX_F, key=km)
    for causal in (False, True):
        y = block(x, context=context, causal=causal)
        jax.block_until_ready(y)
        y_ref = _transformer_block_ref(block, x, context, causal)
        if not bool(jnp.allclose(y, y_ref, atol=2e-2, rtol=2e-2)):
            ok = False

    # Test 2: self-attention-only block with a longer sequence so the flash kernel
    # exercises multiple Q/KV tiles, causal tile skipping and KV DMA clamping.
    B2, N2 = 1, 512
    x2 = jax.random.normal(kx2, (B2, N2, F), jnp.float32)
    block2 = TransformerBlockPallas(F, num_heads=H, head_features=D,
                                    multiplier=MULT, context_features=None, key=km2)
    for causal in (False, True):
        y = block2(x2, causal=causal)
        jax.block_until_ready(y)
        y_ref = _transformer_block_ref(block2, x2, None, causal)
        if not bool(jnp.allclose(y, y_ref, atol=2e-2, rtol=2e-2)):
            ok = False

    print("KERNEL_OK" if ok else "KERNEL_MISMATCH")
</pallas_src>

<mosaic_0001>
module attributes {stable_mosaic.version = 11 : i64} {
  func.func @_ln_proj_kernel(%arg0: i32, %arg1: i32, %arg2: memref<16x32xf32, #tpu.memory_space<vmem>>, %arg3: memref<1x32xf32, #tpu.memory_space<vmem>>, %arg4: memref<1x32xf32, #tpu.memory_space<vmem>>, %arg5: memref<32x32xbf16, #tpu.memory_space<vmem>>, %arg6: memref<16x32xbf16, #tpu.memory_space<vmem>>) attributes {dimension_semantics = [#tpu.dimension_semantics<parallel>, #tpu.dimension_semantics<parallel>], iteration_bounds = array<i64: 1, 1>, scalar_prefetch = 0 : i64, scratch_operands = 0 : i64, tpu.core_type = #tpu.core_type<tc>, window_params = [{transform_indices = @transform_0, window_bounds = array<i64: 16, 32>}, {pipeline_mode = #tpu.pipeline_mode<synchronous>, transform_indices = @transform_1, window_bounds = array<i64: 1, 32>}, {pipeline_mode = #tpu.pipeline_mode<synchronous>, transform_indices = @transform_2, window_bounds = array<i64: 1, 32>}, {transform_indices = @transform_3, window_bounds = array<i64: 32, 32>}, {transform_indices = @transform_4, window_bounds = array<i64: 16, 32>}]} {
    %c0 = arith.constant 0 : index
    %c0_0 = arith.constant 0 : index
    %0 = vector.load %arg2[%c0, %c0_0] : memref<16x32xf32, #tpu.memory_space<vmem>>, vector<16x32xf32>
    %cst = arith.constant dense<0.000000e+00> : vector<16xf32>
    %1 = vector.multi_reduction <add>, %0, %cst [1] : vector<16x32xf32> to vector<16xf32>
    %2 = vector.shape_cast %1 : vector<16xf32> to vector<16x1xf32>
    %cst_1 = arith.constant 3.200000e+01 : f32
    %3 = vector.broadcast %cst_1 : f32 to vector<16x1xf32>
    %4 = arith.divf %2, %3 : vector<16x1xf32>
    %5 = vector.broadcast %4 : vector<16x1xf32> to vector<16x32xf32>
    %6 = arith.subf %0, %5 : vector<16x32xf32>
    %7 = arith.mulf %6, %6 : vector<16x32xf32>
    %cst_2 = arith.constant dense<0.000000e+00> : vector<16xf32>
    %8 = vector.multi_reduction <add>, %7, %cst_2 [1] : vector<16x32xf32> to vector<16xf32>
    %9 = vector.shape_cast %8 : vector<16xf32> to vector<16x1xf32>
    %cst_3 = arith.constant 3.200000e+01 : f32
    %10 = vector.broadcast %cst_3 : f32 to vector<16x1xf32>
    %11 = arith.divf %9, %10 : vector<16x1xf32>
    %cst_4 = arith.constant 9.99999974E-6 : f32
    %12 = vector.broadcast %cst_4 : f32 to vector<16x1xf32>
    %13 = arith.addf %11, %12 : vector<16x1xf32>
    %14 = math.rsqrt %13 : vector<16x1xf32>
    %15 = vector.broadcast %14 : vector<16x1xf32> to vector<16x32xf32>
    %16 = arith.mulf %6, %15 : vector<16x32xf32>
    %c0_5 = arith.constant 0 : index
    %c0_6 = arith.constant 0 : index
    %17 = vector.load %arg3[%c0_5, %c0_6] : memref<1x32xf32, #tpu.memory_space<vmem>>, vector<1x32xf32>
    %18 = vector.broadcast %17 : vector<1x32xf32> to vector<16x32xf32>
    %19 = arith.mulf %16, %18 : vector<16x32xf32>
    %c0_7 = arith.constant 0 : index
    %c0_8 = arith.constant 0 : index
    %20 = vector.load %arg4[%c0_7, %c0_8] : memref<1x32xf32, #tpu.memory_space<vmem>>, vector<1x32xf32>
    %21 = vector.broadcast %20 : vector<1x32xf32> to vector<16x32xf32>
    %22 = arith.addf %19, %21 : vector<16x32xf32>
    %23 = arith.truncf %22 : vector<16x32xf32> to vector<16x32xbf16>
    %c0_9 = arith.constant 0 : index
    %c0_10 = arith.constant 0 : index
    %24 = vector.load %arg5[%c0_9, %c0_10] : memref<32x32xbf16, #tpu.memory_space<vmem>>, vector<32x32xbf16>
    %cst_11 = arith.constant dense<0.000000e+00> : vector<16x32xf32>
    %25 = tpu.matmul %23, %24, %cst_11 {dimension_numbers = #tpu.dot_dimension_numbers<[1], [0], [0], [1], [0, 0, 1, 1], [], []>} : vector<16x32xbf16>, vector<32x32xbf16>, vector<16x32xf32> -> vector<16x32xf32>
    %26 = arith.truncf %25 : vector<16x32xf32> to vector<16x32xbf16>
    %c0_12 = arith.constant 0 : index
    %c0_13 = arith.constant 0 : index
    %27 = vector.load %arg6[%c0_12, %c0_13] : memref<16x32xbf16, #tpu.memory_space<vmem>>, vector<16x32xbf16>
    tpu.vector_store %arg6[%c0_12, %c0_13], %26 {strides = array<i32>} : memref<16x32xbf16, #tpu.memory_space<vmem>>, vector<16x32xbf16>,
    return
  }
  func.func @transform_0(%arg0: i32, %arg1: i32) -> (i32, i32) {
    %c0_i32 = arith.constant 0 : i32
    %c0_i32_0 = arith.constant 0 : i32
    return %arg0, %c0_i32 : i32, i32
  }
  func.func @transform_1(%arg0: i32, %arg1: i32) -> (i32, i32) {
    %c0_i32 = arith.constant 0 : i32
    %c0_i32_0 = arith.constant 0 : i32
    %c0_i32_1 = arith.constant 0 : i32
    return %c0_i32, %c0_i32_0 : i32, i32
  }
  func.func @transform_2(%arg0: i32, %arg1: i32) -> (i32, i32) {
    %c0_i32 = arith.constant 0 : i32
    %c0_i32_0 = arith.constant 0 : i32
    %c0_i32_1 = arith.constant 0 : i32
    return %c0_i32, %c0_i32_0 : i32, i32
  }
  func.func @transform_3(%arg0: i32, %arg1: i32) -> (i32, i32) {
    %c0_i32 = arith.constant 0 : i32
    %c0_i32_0 = arith.constant 0 : i32
    return %c0_i32, %arg1 : i32, i32
  }
  func.func @transform_4(%arg0: i32, %arg1: i32) -> (i32, i32) {
    %c0_i32 = arith.constant 0 : i32
    return %arg0, %arg1 : i32, i32
  }
}

</mosaic_0001>

<llo_original>
// kernel: tpu_custom_call.1
$region0: #{tpu_custom_call.1}
  #allocation0 [shape = 'u32[]', space=smem, size = 0x4, offset = 0x4, fixed_abs, tag = 'smem constant byte address 0x4 - core index']
  #allocation1 [shape = 'u32[72,128]{1,0:T(1,128)}', space=vmem, size = 0x9000, scoped, tag = 'internal scratch']
  %s0 = inlined_call_operand.hbm [shape: f32[16,32], index: 0, kind: input, shape index: {}]
  %s1 = inlined_call_operand.hbm [shape: f32[1,32], index: 1, kind: input, shape index: {}]
  %s2 = inlined_call_operand.vmem [shape: f32[1,32], index: 2, kind: input, shape index: {}]
  %s3 = inlined_call_operand.hbm [shape: bf16[32,32], index: 3, kind: input, shape index: {}]
  %s4 = inlined_call_operand.hbm [shape: bf16[16,32], index: 4, kind: output, shape index: {}]
  %s5 = sld [smem:[#allocation0]]
  $region38: #{tpu_custom_call.1} parent=0
    _
  %s7 = ssub.s32 1, %s5
  %s8 = scalar_select 0, %s7, %s5
  $region1: #{tpu_custom_call.1} parent=0
    #allocation2 [shape = 'u8[8192]{0}', space=vmem, size = 0x2000, scoped, tag = 'input window, operand 0, single buffered']
    #allocation3 [shape = 's32[1]{0}', space=sflag, size = 0x4, scoped, tag = 'scoped memory for tpu_custom_call.1']
    #allocation4 [shape = 's32[1]{0}', space=sflag, size = 0x4, scoped, tag = 'scoped memory for tpu_custom_call.1']
    #allocation5 [shape = 'u8[512]{0}', space=vmem, size = 0x400, scoped, tag = 'input window, operand 1, single buffered']
    #allocation6 [shape = 's32[1]{0}', space=sflag, size = 0x4, scoped, tag = 'scoped memory for tpu_custom_call.1']
    #allocation7 [shape = 'u8[8192]{0}', space=vmem, size = 0x2000, scoped, tag = 'input window, operand 3, single buffered']
    #allocation8 [shape = 'u8[4096]{0}', space=vmem, size = 0x1000, scoped, tag = 'output window, operand 0, single buffered']
    %9 = vsyncpa [#allocation3], 0
    %10 = vsyncpa [#allocation6], 0
    %11 = vsyncpa [#allocation4], 0
    // Predicated region
    $region2: #{tpu_custom_call.1} parent=1 // pred_check
      _
    $region3: #{tpu_custom_call.1} parent=1 // pred_check_branch
      %13 = sbr.rel (0) target = $region5
    $region4: #{tpu_custom_call.1} parent=1 // pred_region
      %15 = vsyncadd [#allocation3], 0
      %s16 = sshll.u32 %s0, 4
      %s17 = int_to_ptr.hbm [resolvable:$true] %s16
      %s18 = sshll.u32 [#allocation2], 4
      %s19 = int_to_ptr.vmem [resolvable:$true] %s18
      %24 = dma.hbm_to_vmem [thread:$0]  %s17, 256, %s19, [#allocation3], 128, 128, 8
    $region5: #{tpu_custom_call.1} parent=1 // pred_fallthru
      _
    // Predicated region
    $region6: #{tpu_custom_call.1} parent=1 // pred_check
      _
    $region7: #{tpu_custom_call.1} parent=1 // pred_check_branch
      %26 = sbr.rel (0) target = $region9
    $region8: #{tpu_custom_call.1} parent=1 // pred_region
      %28 = vsyncadd [#allocation6], 0
      %s30 = sshll.u32 %s1, 4
      %s31 = int_to_ptr.hbm [resolvable:$true] %s30
      %s32 = sshll.u32 [#allocation5], 4
      %s33 = int_to_ptr.vmem [resolvable:$true] %s32
      %35 = dma.hbm_to_vmem [thread:$0]  %s31, 16, %s33, [#allocation6]
    $region9: #{tpu_custom_call.1} parent=1 // pred_fallthru
      _
    // Predicated region
    $region10: #{tpu_custom_call.1} parent=1 // pred_check
      _
    $region11: #{tpu_custom_call.1} parent=1 // pred_check_branch
      %37 = sbr.rel (0) target = $region13
    $region12: #{tpu_custom_call.1} parent=1 // pred_region
      _
    $region13: #{tpu_custom_call.1} parent=1 // pred_fallthru
      _
    // Predicated region
    $region14: #{tpu_custom_call.1} parent=1 // pred_check
      _
    $region15: #{tpu_custom_call.1} parent=1 // pred_check_branch
      %39 = sbr.rel (0) target = $region17
    $region16: #{tpu_custom_call.1} parent=1 // pred_region
      %41 = vsyncadd [#allocation6], 0
      %s42 = sshll.u32 %s3, 4
      %s43 = int_to_ptr.hbm [resolvable:$true] %s42
      %s44 = sshll.u32 [#allocation7], 4
      %s45 = int_to_ptr.vmem [resolvable:$true] %s44
      %50 = dma.hbm_to_vmem [thread:$0]  %s43, 256, %s45, [#allocation6], 64, 64, 4
    $region17: #{tpu_custom_call.1} parent=1 // pred_fallthru
      _
    // Predicated region
    $region18: #{tpu_custom_call.1} parent=1 // pred_check
      _
    $region19: #{tpu_custom_call.1} parent=1 // pred_check_branch
      %52 = sbr.rel (0) target = $region21
    $region20: #{tpu_custom_call.1} parent=1 // pred_region
      %54 = dma.done [#allocation3], 256
    $region21: #{tpu_custom_call.1} parent=1 // pred_fallthru
      _
    // Predicated region
    $region22: #{tpu_custom_call.1} parent=1 // pred_check
      _
    $region23: #{tpu_custom_call.1} parent=1 // pred_check_branch
      %56 = sbr.rel (0) target = $region25
    $region24: #{tpu_custom_call.1} parent=1 // pred_region
      %58 = dma.done [#allocation6], 16
    $region25: #{tpu_custom_call.1} parent=1 // pred_fallthru
      _
    // Predicated region
    $region26: #{tpu_custom_call.1} parent=1 // pred_check
      _
    $region27: #{tpu_custom_call.1} parent=1 // pred_check_branch
      %60 = sbr.rel (0) target = $region29
    $region28: #{tpu_custom_call.1} parent=1 // pred_region
      %62 = dma.done [#allocation6], 256
    $region29: #{tpu_custom_call.1} parent=1 // pred_fallthru
      _
    %v64 = vld [vmem:[#allocation2] sm:$0xff]
    %v65 = vld [vmem:[#allocation2 + $0x8] sm:$0xff]
    %vm66 = vcmask 261120
    %v67 = vsel %vm66, %v64, 0.0
    %68 = vadd.xlane.f32.xlu0 %v67
    %v69 = vpop.xlane.xlu0 %68
    %v70 = vsel %vm66, %v65, 0.0
    %71 = vadd.xlane.f32.xlu0 %v70
    %v72 = vpop.xlane.xlu0 %71
    %v73 = vrcp.pop 32.0
    %v74 = vmul.f32 32.0, %v73
    %v75 = vsub.f32 1.0, %v74
    %v76 = vmul.f32 %v73, %v75
    %v77 = vadd.f32 %v73, %v76
    %vm78 = vweird.f32 %v73
    %v79 = vsel %vm78, %v73, %v77
    %v80 = vmul.f32 %v69, %v79
    %v81 = vmul.f32 %v72, %v79
    %v82 = vsub.f32 %v64, %v80
    %v83 = vsub.f32 %v65, %v81
    %v84 = vmul.f32 %v82, %v82
    %v85 = vmul.f32 %v83, %v83
    %v86 = vsel %vm66, %v84, 0.0
    %87 = vadd.xlane.f32.xlu0 %v86
    %v88 = vpop.xlane.xlu0 %87
    %v89 = vsel %vm66, %v85, 0.0
    %90 = vadd.xlane.f32.xlu0 %v89
    %v91 = vpop.xlane.xlu0 %90
    %v92 = vmul.f32 %v88, %v79
    %v93 = vmul.f32 %v91, %v79
    %v94 = vadd.f32 %v92, 1e-05
    %v95 = vadd.f32 %v93, 1e-05
    %v96 = vrsqrt.pop %v94
    %v97 = vmul.f32 %v96, %v94
    %v98 = vmul.f32 %v97, %v96
    %v99 = vmul.f32 0.5, %v98
    %v100 = vsub.f32 1.5, %v99
    %v101 = vmul.f32 %v96, %v100
    %vm102 = vweird.f32 %v94
    %vm103 = vweird.f32 %v96
    %vm104 = vmor %vm102, %vm103
    %v105 = vsel %vm104, %v96, %v101
    %v106 = vrsqrt.pop %v95
    %v107 = vmul.f32 %v106, %v95
    %v108 = vmul.f32 %v107, %v106
    %v109 = vmul.f32 0.5, %v108
    %v110 = vsub.f32 1.5, %v109
    %v111 = vmul.f32 %v106, %v110
    %vm112 = vweird.f32 %v95
    %vm113 = vweird.f32 %v106
    %vm114 = vmor %vm112, %vm113
    %v115 = vsel %vm114, %v106, %v111
    %v116 = vmul.f32 %v82, %v105
    %v117 = vmul.f32 %v83, %v115
    %v118 = vld [vmem:[#allocation5] sm:$0x1]
    %v120 = vperm.slane %v118, 0
    %v122 = vmul.f32 %v116, %v120
    %v123 = vmul.f32 %v117, %v120
    %v124 = vld [vmem:[%s2] sm:$0x1]
    %v126 = vperm.slane %v124, 0
    %v128 = vadd.f32 %v122, %v126
    %v129 = vadd.f32 %v123, %v126
    %v130 = vpack.c.bf16 %v129, %v128
    %v131 = vld [vmem:[#allocation7] sm:$0xf]
    %v132 = vld [vmem:[#allocation7 + $0x4] sm:$0xf]
    %v133 = vld [vmem:[#allocation7 + $0x8] sm:$0xf]
    %v134 = vld [vmem:[#allocation7 + $0xc] sm:$0xf]
    %v139 = vunpack.c.l.b16 %v131
    %v140 = vunpack.c.l.b16 %v132
    %v141 = vunpack.c.l.b16 %v133
    %v142 = vunpack.c.l.b16 %v134
    %v143 = vpack.c.b16 %v140, %v139
    %v144 = vpack.c.b16 %v142, %v141
    %v148 = vsel %vm66, %v130, 0
    %150 = vmatpush.bf16.msra.mxu0 0
    %151 = vmatpush.bf16.msra.mxu0 0
    %152 = vmatpush.bf16.msra.mxu0 0
    %153 = vmatpush.bf16.msra.mxu0 0
    %154 = vmatpush.bf16.msra.mxu0 0
    %155 = vmatpush.bf16.msra.mxu0 0
    %156 = vmatpush.bf16.msra.mxu0 %v144
    %157 = vmatpush.bf16.msra.mxu0 %v143
    %158 = vmatmul.bf16.gmra.mxu0 %v148
    %v159 = vpop.f32.mrf.mxu0
    %v160 = vadd.f32 0.0, %v159
    %v161 = vpop.f32.mrf.mxu0
    %v162 = vadd.f32 0.0, %v161
    %163 = vdwg.mxu0
    %v164 = vpack.c.bf16 %v160, %v160
    %v165 = vpack.c.bf16 %v162, %v162
    %vm166 = vcmask 257024
    %167 = vst.msk [vmem:[#allocation8] sm:$0xf] %vm166, %v164
    %168 = vst.msk [vmem:[#allocation8 + $0x4] sm:$0xf] %vm166, %v165
    // Predicated region
    $region30: #{tpu_custom_call.1} parent=1 // pred_check
      _
    $region31: #{tpu_custom_call.1} parent=1 // pred_check_branch
      %170 = sbr.rel (0) target = $region33
    $region32: #{tpu_custom_call.1} parent=1 // pred_region
      %172 = vsyncadd [#allocation4], 0
      %s173 = sshll.u32 [#allocation8], 4
      %s174 = int_to_ptr.vmem [resolvable:$true] %s173
      %s175 = sshll.u32 %s4, 4
      %s176 = int_to_ptr.hbm [resolvable:$true] %s175
      %181 = dma.vmem_to_hbm [thread:$0]  %s174, 128, %s176, [#allocation4], 64, 64, 4
    $region33: #{tpu_custom_call.1} parent=1 // pred_fallthru
      _
    // Predicated region
    $region34: #{tpu_custom_call.1} parent=1 // pred_check
      _
    $region35: #{tpu_custom_call.1} parent=1 // pred_check_branch
      %183 = sbr.rel (0) target = $region37
    $region36: #{tpu_custom_call.1} parent=1 // pred_region
      %185 = dma.done [#allocation4], 128
    $region37: #{tpu_custom_call.1} parent=1 // pred_fallthru
      _
    %186 = vsyncpa [#allocation3], 1
    %187 = vsyncpa [#allocation6], 1
    %188 = vsyncpa [#allocation4], 1

</llo_original>
